<compile_context>
chip_gen: v7x
topology: tpu7x:2x2x1
jax: 0.10.0
libtpu: 0.0.40
codegen_flags: <defaults>
</compile_context>

<pallas_src>
import jax
import jax.numpy as jnp
from jax.experimental import pallas as pl
from jax.experimental.pallas import tpu as pltpu


_NEG_BIG = jnp.float32(-1e30)  # effectively -inf for padded classes, NaN-safe


def _logreg_kernel(x_ref, w_ref, b_ref, o_ref):
    # MXU matmul on bf16 tiles with f32 accumulation.
    phi = jnp.dot(x_ref[...], w_ref[...], preferred_element_type=jnp.float32)
    phi = phi + b_ref[...]                        # (TILE_N, Cp) + (1, Cp)
    # Numerically-stable softmax, all f32 (v5e has no bf16 VPU/EUP paths).
    m = jnp.max(phi, axis=1, keepdims=True)
    e = jnp.exp(phi - m)                          # padded cols -> exp(-huge) = 0
    denom = jnp.sum(e, axis=1, keepdims=True)
    o_ref[...] = (e * pl.reciprocal(denom, approx=True)).astype(o_ref.dtype)


def pt_logreg_forward(X, W, b, *, tile_n_target=512):
    """Pallas equivalent of PTLogreg.forward: softmax(X @ W + b, axis=1)."""
    N, D = X.shape
    Dw, C = W.shape
    assert D == Dw

    # Lane-dense class axis: pad C up to a multiple of 128.
    C_pad = ((C + 127) // 128) * 128
    # Batch tiling: 8-aligned tile, up to tile_n_target rows.
    TILE_N = min(tile_n_target, ((N + 7) // 8) * 8)
    N_pad = ((N + TILE_N - 1) // TILE_N) * TILE_N

    # bf16 input streams (halve HBM bytes); zero-pad batch rows / class cols.
    Xp = jnp.zeros((N_pad, D), jnp.bfloat16).at[:N, :].set(X.astype(jnp.bfloat16))
    Wp = jnp.zeros((D, C_pad), jnp.bfloat16).at[:, :C].set(W.astype(jnp.bfloat16))
    # Padded classes get a huge negative bias so softmax assigns them 0 prob.
    bp = jnp.full((1, C_pad), _NEG_BIG, jnp.float32).at[0, :C].set(
        b.reshape(-1).astype(jnp.float32))

    grid = (N_pad // TILE_N,)

    # VMEM budget: double-buffered X tile (bf16) + output tile (f32),
    # plus resident W (bf16) and bias (f32). Cap at 64 MiB for v7x.
    working_set = (2 * TILE_N * D * 2          # X tiles, 2 buffers, bf16
                   + 2 * TILE_N * C_pad * 4    # out tiles, 2 buffers, f32
                   + D * C_pad * 2             # resident W, bf16
                   + C_pad * 4)                # resident bias, f32
    vmem_limit = min(64 << 20, max(16 << 20, 2 * working_set + (1 << 20)))

    probs_pad = pl.pallas_call(
        _logreg_kernel,
        out_shape=jax.ShapeDtypeStruct((N_pad, C_pad), jnp.float32),
        grid_spec=pl.GridSpec(
            grid=grid,
            in_specs=[
                pl.BlockSpec((TILE_N, D), lambda i: (i, 0)),      # streamed X tile
                pl.BlockSpec((D, C_pad), lambda i: (0, 0)),       # resident W
                pl.BlockSpec((1, C_pad), lambda i: (0, 0)),       # resident bias
            ],
            out_specs=pl.BlockSpec((TILE_N, C_pad), lambda i: (i, 0)),
        ),
        compiler_params=pltpu.CompilerParams(
            dimension_semantics=("parallel",),   # N axis -> both TCs on v7x
            vmem_limit_bytes=vmem_limit,
        ),
    )(Xp, Wp, bp)

    # Strip batch/class padding back to the module's (N, C) output.
    return probs_pad[:N, :C]


if __name__ == "__main__":
    # Small shapes consistent with PTLogreg(D, C): N datapoints of dim D, C classes.
    N, D, C = 8, 32, 16

    key = jax.random.PRNGKey(0)
    kx, kw = jax.random.split(key)

    # Deterministic init matching the module: W ~ randn(D, C), b = zeros(C).
    W = jax.random.normal(kw, (D, C), dtype=jnp.float32)
    b = jnp.zeros((C,), dtype=jnp.float32)
    X = jax.random.normal(kx, (N, D), dtype=jnp.float32)

    probs = pt_logreg_forward(X, W, b)
    probs = jax.block_until_ready(probs)

    # Tight check vs a reference that uses the same bf16 input casting.
    logits_bf16 = jnp.dot(X.astype(jnp.bfloat16), W.astype(jnp.bfloat16),
                          preferred_element_type=jnp.float32) + b[None, :]
    ref_bf16 = jax.nn.softmax(logits_bf16, axis=1)
    assert jnp.allclose(probs, ref_bf16, atol=5e-3, rtol=5e-3), "mismatch vs bf16 reference"

    # Loose check vs the full-f32 module semantics (bf16 input rounding).
    ref_f32 = jax.nn.softmax(X @ W + b[None, :], axis=1)
    assert jnp.allclose(probs, ref_f32, atol=5e-2, rtol=5e-2), "mismatch vs f32 reference"

    # approx=True reciprocal -> rows sum to 1 within ~1e-3.
    assert jnp.allclose(jnp.sum(probs, axis=1), 1.0, atol=5e-3), "rows must sum to ~1"

    print("KERNEL_OK")
</pallas_src>

<mosaic_0001>
module attributes {stable_mosaic.version = 11 : i64} {
  func.func @_logreg_kernel(%arg0: i32, %arg1: memref<8x32xbf16, #tpu.memory_space<vmem>>, %arg2: memref<32x128xbf16, #tpu.memory_space<vmem>>, %arg3: memref<1x128xf32, #tpu.memory_space<vmem>>, %arg4: memref<8x128xf32, #tpu.memory_space<vmem>>) attributes {dimension_semantics = [#tpu.dimension_semantics<parallel>], iteration_bounds = array<i64: 1>, scalar_prefetch = 0 : i64, scratch_operands = 0 : i64, tpu.core_type = #tpu.core_type<tc>, window_params = [{transform_indices = @transform_0, window_bounds = array<i64: 8, 32>}, {pipeline_mode = #tpu.pipeline_mode<synchronous>, transform_indices = @transform_1, window_bounds = array<i64: 32, 128>}, {pipeline_mode = #tpu.pipeline_mode<synchronous>, transform_indices = @transform_2, window_bounds = array<i64: 1, 128>}, {transform_indices = @transform_3, window_bounds = array<i64: 8, 128>}]} {
    %c0 = arith.constant 0 : index
    %c0_0 = arith.constant 0 : index
    %0 = vector.load %arg1[%c0, %c0_0] : memref<8x32xbf16, #tpu.memory_space<vmem>>, vector<8x32xbf16>
    %c0_1 = arith.constant 0 : index
    %c0_2 = arith.constant 0 : index
    %1 = vector.load %arg2[%c0_1, %c0_2] : memref<32x128xbf16, #tpu.memory_space<vmem>>, vector<32x128xbf16>
    %cst = arith.constant dense<0.000000e+00> : vector<8x128xf32>
    %2 = tpu.matmul %0, %1, %cst {dimension_numbers = #tpu.dot_dimension_numbers<[1], [0], [0], [1], [0, 0, 1, 1], [], []>} : vector<8x32xbf16>, vector<32x128xbf16>, vector<8x128xf32> -> vector<8x128xf32>
    %c0_3 = arith.constant 0 : index
    %c0_4 = arith.constant 0 : index
    %3 = vector.load %arg3[%c0_3, %c0_4] : memref<1x128xf32, #tpu.memory_space<vmem>>, vector<1x128xf32>
    %4 = vector.broadcast %3 : vector<1x128xf32> to vector<8x128xf32>
    %5 = arith.addf %2, %4 : vector<8x128xf32>
    %cst_5 = arith.constant dense<0xFF800000> : vector<8xf32>
    %6 = vector.multi_reduction <maximumf>, %5, %cst_5 [1] : vector<8x128xf32> to vector<8xf32>
    %7 = vector.shape_cast %6 : vector<8xf32> to vector<8x1xf32>
    %8 = vector.broadcast %7 : vector<8x1xf32> to vector<8x128xf32>
    %9 = arith.subf %5, %8 : vector<8x128xf32>
    %10 = math.exp %9 : vector<8x128xf32>
    %cst_6 = arith.constant dense<0.000000e+00> : vector<8xf32>
    %11 = vector.multi_reduction <add>, %10, %cst_6 [1] : vector<8x128xf32> to vector<8xf32>
    %12 = vector.shape_cast %11 : vector<8xf32> to vector<8x1xf32>
    %13 = tpu.reciprocal %12 {approx = true} : vector<8x1xf32> -> vector<8x1xf32>
    %14 = vector.broadcast %13 : vector<8x1xf32> to vector<8x128xf32>
    %15 = arith.mulf %10, %14 : vector<8x128xf32>
    %c0_7 = arith.constant 0 : index
    %c0_8 = arith.constant 0 : index
    %16 = vector.load %arg4[%c0_7, %c0_8] : memref<8x128xf32, #tpu.memory_space<vmem>>, vector<8x128xf32>
    tpu.vector_store %arg4[%c0_7, %c0_8], %15 {strides = array<i32>} : memref<8x128xf32, #tpu.memory_space<vmem>>, vector<8x128xf32>,
    return
  }
  func.func @transform_0(%arg0: i32) -> (i32, i32) {
    %c0_i32 = arith.constant 0 : i32
    %c0_i32_0 = arith.constant 0 : i32
    return %arg0, %c0_i32 : i32, i32
  }
  func.func @transform_1(%arg0: i32) -> (i32, i32) {
    %c0_i32 = arith.constant 0 : i32
    %c0_i32_0 = arith.constant 0 : i32
    %c0_i32_1 = arith.constant 0 : i32
    return %c0_i32, %c0_i32_0 : i32, i32
  }
  func.func @transform_2(%arg0: i32) -> (i32, i32) {
    %c0_i32 = arith.constant 0 : i32
    %c0_i32_0 = arith.constant 0 : i32
    %c0_i32_1 = arith.constant 0 : i32
    return %c0_i32, %c0_i32_0 : i32, i32
  }
  func.func @transform_3(%arg0: i32) -> (i32, i32) {
    %c0_i32 = arith.constant 0 : i32
    %c0_i32_0 = arith.constant 0 : i32
    return %arg0, %c0_i32 : i32, i32
  }
}

</mosaic_0001>

<llo_original>
// kernel: tpu_custom_call.1
$region0: #{tpu_custom_call.1}
  #allocation0 [shape = 'u32[]', space=smem, size = 0x4, offset = 0x4, fixed_abs, tag = 'smem constant byte address 0x4 - core index']
  #allocation1 [shape = 'u32[144,128]{1,0:T(1,128)}', space=vmem, size = 0x12000, scoped, tag = 'internal scratch']
  %s0 = inlined_call_operand.hbm [shape: bf16[8,32], index: 0, kind: input, shape index: {}]
  %s1 = inlined_call_operand.hbm [shape: bf16[32,128], index: 1, kind: input, shape index: {}]
  %s2 = inlined_call_operand.vmem [shape: f32[1,128], index: 2, kind: input, shape index: {}]
  %s3 = inlined_call_operand.hbm [shape: f32[8,128], index: 3, kind: output, shape index: {}]
  %s4 = sld [smem:[#allocation0]]
  $region30: #{tpu_custom_call.1} parent=0
    _
  %s6 = ssub.s32 1, %s4
  %s7 = scalar_select 0, %s6, %s4
  $region1: #{tpu_custom_call.1} parent=0
    #allocation2 [shape = 'u8[2048]{0}', space=vmem, size = 0x800, scoped, tag = 'input window, operand 0, single buffered']
    #allocation3 [shape = 's32[1]{0}', space=sflag, size = 0x4, scoped, tag = 'scoped memory for tpu_custom_call.1']
    #allocation4 [shape = 's32[1]{0}', space=sflag, size = 0x4, scoped, tag = 'scoped memory for tpu_custom_call.1']
    #allocation5 [shape = 'u8[8192]{0}', space=vmem, size = 0x2000, scoped, tag = 'input window, operand 1, single buffered']
    #allocation6 [shape = 's32[1]{0}', space=sflag, size = 0x4, scoped, tag = 'scoped memory for tpu_custom_call.1']
    #allocation7 [shape = 'u8[4096]{0}', space=vmem, size = 0x1000, scoped, tag = 'output window, operand 0, single buffered']
    %8 = vsyncpa [#allocation3], 0
    %9 = vsyncpa [#allocation6], 0
    %10 = vsyncpa [#allocation4], 0
    // Predicated region
    $region2: #{tpu_custom_call.1} parent=1 // pred_check
      _
    $region3: #{tpu_custom_call.1} parent=1 // pred_check_branch
      %12 = sbr.rel (0) target = $region5
    $region4: #{tpu_custom_call.1} parent=1 // pred_region
      %s14 = ssub.s32 64, 64
      %15 = vsyncadd [#allocation3], %s14
      %s17 = sshll.u32 [#allocation2], 4
      %s18 = int_to_ptr.vmem [resolvable:$true] %s17
      %20 = dma.hbm_to_vmem [thread:$0]  %s0, 64, %s18, [#allocation3]
    $region5: #{tpu_custom_call.1} parent=1 // pred_fallthru
      _
    // Predicated region
    $region6: #{tpu_custom_call.1} parent=1 // pred_check
      _
    $region7: #{tpu_custom_call.1} parent=1 // pred_check_branch
      %22 = sbr.rel (0) target = $region9
    $region8: #{tpu_custom_call.1} parent=1 // pred_region
      %s24 = ssub.s32 256, 256
      %25 = vsyncadd [#allocation6], %s24
      %s26 = sshll.u32 [#allocation5], 4
      %s27 = int_to_ptr.vmem [resolvable:$true] %s26
      %32 = dma.hbm_to_vmem [thread:$0]  %s1, 256, %s27, [#allocation6], 64, 64, 4
    $region9: #{tpu_custom_call.1} parent=1 // pred_fallthru
      _
    // Predicated region
    $region10: #{tpu_custom_call.1} parent=1 // pred_check
      _
    $region11: #{tpu_custom_call.1} parent=1 // pred_check_branch
      %34 = sbr.rel (0) target = $region13
    $region12: #{tpu_custom_call.1} parent=1 // pred_region
      _
    $region13: #{tpu_custom_call.1} parent=1 // pred_fallthru
      _
    // Predicated region
    $region14: #{tpu_custom_call.1} parent=1 // pred_check
      _
    $region15: #{tpu_custom_call.1} parent=1 // pred_check_branch
      %36 = sbr.rel (0) target = $region17
    $region16: #{tpu_custom_call.1} parent=1 // pred_region
      %37 = dma.done [#allocation3], 64
    $region17: #{tpu_custom_call.1} parent=1 // pred_fallthru
      _
    // Predicated region
    $region18: #{tpu_custom_call.1} parent=1 // pred_check
      _
    $region19: #{tpu_custom_call.1} parent=1 // pred_check_branch
      %39 = sbr.rel (0) target = $region21
    $region20: #{tpu_custom_call.1} parent=1 // pred_region
      %40 = dma.done [#allocation6], 256
    $region21: #{tpu_custom_call.1} parent=1 // pred_fallthru
      _
    %v42 = vld [vmem:[#allocation2] sm:$0xf]
    %v43 = vld [vmem:[#allocation5] sm:$0xf]
    %v44 = vld [vmem:[#allocation5 + $0x4] sm:$0xf]
    %v45 = vld [vmem:[#allocation5 + $0x8] sm:$0xf]
    %v46 = vld [vmem:[#allocation5 + $0xc] sm:$0xf]
    %v47 = vld [vmem:[%s2] sm:$0x1]
    %v49 = vlaneseq
    %v50 = vshrl.u32 %v49, 7
    %v51 = vsub.s32 0, %v50
    %v52 = vrot.slane %v47, %v51
    %v58 = vunpack.c.l.b16 %v43
    %v59 = vunpack.c.l.b16 %v44
    %v60 = vunpack.c.l.b16 %v45
    %v61 = vunpack.c.l.b16 %v46
    %v62 = vpack.c.b16 %v59, %v58
    %v63 = vpack.c.b16 %v61, %v60
    %vm66 = vcmask 261120
    %v68 = vsel %vm66, %v42, 0
    %70 = vmatprep.subr.bf16.mxu0 0
    %71 = vmatpush1.bf16.msra.mxu0 %v62
    %72 = vmatprep.subr.bf16.mxu0 0
    %73 = vmatpush1.bf16.msra.mxu0 %v63
    %74 = vmatprep.subr.bf16.mxu0 0
    %75 = vmatpush1.bf16.msra.mxu0 0
    %76 = vmatprep.subr.bf16.mxu0 0
    %77 = vmatpush1.bf16.msra.mxu0 0
    %78 = vmatprep.subr.bf16.mxu0 0
    %79 = vmatpush1.bf16.msra.mxu0 0
    %80 = vmatprep.subr.bf16.mxu0 0
    %81 = vmatpush1.bf16.msra.mxu0 0
    %82 = vmatprep.subr.bf16.mxu0 0
    %83 = vmatpush1.bf16.msra.mxu0 0
    %84 = vmatprep.subr.bf16.mxu0 0
    %85 = vmatpush1.bf16.msra.mxu0 0
    %86 = vmatprep.subr.bf16.mxu0 0
    %87 = vmatpush1.bf16.msra.mxu0 0
    %88 = vmatprep.subr.bf16.mxu0 0
    %89 = vmatpush1.bf16.msra.mxu0 0
    %90 = vmatprep.subr.bf16.mxu0 0
    %91 = vmatpush1.bf16.msra.mxu0 0
    %92 = vmatprep.subr.bf16.mxu0 0
    %93 = vmatpush1.bf16.msra.mxu0 0
    %94 = vmatprep.subr.bf16.mxu0 0
    %95 = vmatpush1.bf16.msra.mxu0 0
    %96 = vmatprep.subr.bf16.mxu0 0
    %97 = vmatpush1.bf16.msra.mxu0 0
    %98 = vmatprep.subr.bf16.mxu0 0
    %99 = vmatpush1.bf16.msra.mxu0 0
    %100 = vmatprep.subr.bf16.mxu0 0
    %101 = vmatpush1.bf16.msra.mxu0 0
    %102 = vmatprep.mubr.bf16.mxu0 0
    %103 = vmatmul.mubr.bf16.gmra.mrb[0].mxu0 %v68
    %v104 = vpop.f32.mrb[0].mxu0
    %v105 = vadd.f32 %v52, %v104
    %v106 = vpop.f32.mrb[0].mxu0
    %v107 = vpop.f32.mrb[0].mxu0
    %v108 = vpop.f32.mrb[0].mxu0
    %109 = vdwg.mxu0
    %110 = vmax.xlane.f32.xlu0 %v105
    %v111 = vpop.xlane.xlu0 %110
    %v112 = vsub.f32 %v105, %v111
    %v113 = vmul.f32 %v112, 1.442695
    %v114 = vpow.pop %v113
    %115 = vadd.xlane.f32.xlu0 %v114
    %v116 = vpop.xlane.xlu0 %115
    %v117 = vrcp.pop %v116
    %v118 = vmul.f32 %v114, %v117
    %119 = vst [vmem:[#allocation7] sm:$0xff] %v118
    // Predicated region
    $region22: #{tpu_custom_call.1} parent=1 // pred_check
      _
    $region23: #{tpu_custom_call.1} parent=1 // pred_check_branch
      %121 = sbr.rel (0) target = $region25
    $region24: #{tpu_custom_call.1} parent=1 // pred_region
      %s123 = ssub.s32 128, 128
      %124 = vsyncadd [#allocation4], %s123
      %s126 = sshll.u32 [#allocation7], 4
      %s127 = int_to_ptr.vmem [resolvable:$true] %s126
      %129 = dma.vmem_to_hbm [thread:$0]  %s127, 128, %s3, [#allocation4]
    $region25: #{tpu_custom_call.1} parent=1 // pred_fallthru
      _
    // Predicated region
    $region26: #{tpu_custom_call.1} parent=1 // pred_check
      _
    $region27: #{tpu_custom_call.1} parent=1 // pred_check_branch
      %131 = sbr.rel (0) target = $region29
    $region28: #{tpu_custom_call.1} parent=1 // pred_region
      %132 = dma.done [#allocation4], 128
    $region29: #{tpu_custom_call.1} parent=1 // pred_fallthru
      _
    %133 = vsyncpa [#allocation3], 1
    %134 = vsyncpa [#allocation6], 1
    %135 = vsyncpa [#allocation4], 1

</llo_original>
